<compile_context>
chip_gen: v5e
topology: v5e:2x2
jax: 0.10.0
libtpu: 0.0.40
codegen_flags: <defaults>
</compile_context>

<pallas_src>
import jax
import jax.numpy as jnp
from jax import lax
from jax.experimental import pallas as pl
from jax.experimental.pallas import tpu as pltpu

NUM_OBSERVATIONS = 512          # original script uses 50000; kept small & runnable
IN_FEATURES = NUM_OBSERVATIONS * 2
BATCH = 2

_LANES = 128
_SUBLANES = 8


def logreg_kernel(x_ref, w_ref, b_ref, o_ref):
    """One batch row per grid step: GEMV (VALU accumulate) + bias + sigmoid.

    x_ref: (1, R, 128) f32 VMEM   -- one row's lane/sublane-dense feature slab
    w_ref: (R, 128)    f32 VMEM   -- weights in the same slab layout (resident)
    b_ref: (1,)        f32 SMEM   -- bias scalar
    o_ref: (1, 1, 128) f32 VMEM   -- sigmoid output broadcast across lanes
    """
    r = x_ref.shape[1]
    c = _SUBLANES                       # 8-sublane chunk -> (1, 8, 128) = one vreg
    n_chunks = r // c
    r_main = n_chunks * c

    acc0 = jnp.zeros((1, c, _LANES), jnp.float32)

    def body(i, acc):
        off = pl.multiple_of(i * c, c)
        xa = x_ref[:, pl.ds(off, c), :]            # (1, 8, 128)
        wa = w_ref[pl.ds(off, c), :]               # (8, 128)
        return acc + xa * wa                       # VALU mul+add, no product temp

    if n_chunks > 0:
        acc = lax.fori_loop(0, n_chunks, body, acc0, unroll=min(n_chunks, 8))
    else:
        acc = acc0

    # Single cross-lane + cross-sublane reduce (XLU) for the whole row.
    z = jnp.sum(acc, axis=(1, 2)).reshape(1, 1)

    # Ragged sublane tail (R % 8 != 0): static-size slice, added once.
    if r_main < r:
        z = z + jnp.sum(x_ref[:, r_main:, :] * w_ref[r_main:, :],
                        axis=(1, 2)).reshape(1, 1)

    z = z + b_ref[0]                               # bias read from SMEM
    y = pl.reciprocal(1.0 + jnp.exp(-z))           # exp on EUP, exact reciprocal
    o_ref[...] = jnp.broadcast_to(y[..., None], o_ref.shape).astype(o_ref.dtype)


def prepare_params(weight, bias):
    """One-time weight/bias layout prep — hoisted out of the per-call path."""
    d = weight.shape[-1]
    pad = (-d) % _LANES
    w = weight.reshape(-1).astype(jnp.float32)
    if pad:
        w = jnp.pad(w, (0, pad))                   # weights only: tiny, one-time
    w_slab = w.reshape((d + pad) // _LANES, _LANES)
    b = bias.reshape(1).astype(jnp.float32)
    return w_slab, b


@jax.jit
def logistic_regression(x, w_slab, b):
    """x: (B, D) f32, w_slab: (R, 128) f32, b: (1,) f32 -> (B, 1) f32."""
    batch, d = x.shape
    r = w_slab.shape[0]
    pad = r * _LANES - d
    if pad:
        # TODO(synk): for D % 128 != 0 this still copies x once (pad to the next
        # multiple of 128); a fully copy-free ragged path would mask the final
        # lane chunk in-kernel.  Not hit for the multiple-of-128 sizes used here.
        x = jnp.pad(x, ((0, 0), (0, pad)))
    x_slab = x.reshape(batch, r, _LANES)           # free reshape: splits the last dim

    out = pl.pallas_call(
        logreg_kernel,
        out_shape=jax.ShapeDtypeStruct((batch, 1, _LANES), jnp.float32),
        grid=(batch,),                             # one row per step; 2 TCs on v7x
        in_specs=[
            pl.BlockSpec((1, r, _LANES), lambda i: (i, 0, 0)),   # x row slab
            pl.BlockSpec((r, _LANES), lambda i: (0, 0)),         # resident weights
            pl.BlockSpec(memory_space=pltpu.MemorySpace.SMEM),   # bias scalar
        ],
        out_specs=pl.BlockSpec((1, 1, _LANES), lambda i: (i, 0, 0)),
        compiler_params=pltpu.CompilerParams(
            dimension_semantics=("parallel",)),
    )(x_slab, w_slab, b)
    return out[:, 0, :1]                           # (B, 1)


if __name__ == "__main__":
    key = jax.random.PRNGKey(0)
    kx, kw, kb = jax.random.split(key, 3)

    # PyTorch Linear default init: U(-1/sqrt(fan_in), 1/sqrt(fan_in)).
    bound = 1.0 / jnp.sqrt(jnp.float32(IN_FEATURES))
    weight = jax.random.uniform(kw, (1, IN_FEATURES), jnp.float32, -bound, bound)
    bias = jax.random.uniform(kb, (1,), jnp.float32, -bound, bound)
    x = jax.random.normal(kx, (BATCH, IN_FEATURES), jnp.float32)

    w_slab, b = prepare_params(weight, bias)       # one-time layout prep
    y = logistic_regression(x, w_slab, b)
    jax.block_until_ready(y)

    # Reference (plain JAX) — same forward as the PyTorch module.
    y_ref = jax.nn.sigmoid(x @ weight.T + bias)
    assert y.shape == (BATCH, 1)
    assert jnp.allclose(y, y_ref, atol=1e-5, rtol=1e-5)

    # TODO(synk): torch.nn.DataParallel in the original script is a multi-device
    # execution wrapper with no single-kernel Pallas equivalent (forward math unchanged).
    print("KERNEL_OK")
</pallas_src>

<mosaic_0001>
module attributes {stable_mosaic.version = 11 : i64} {
  func.func @logreg_kernel(%arg0: i32, %arg1: memref<1x8x128xf32, #tpu.memory_space<vmem>>, %arg2: memref<8x128xf32, #tpu.memory_space<vmem>>, %arg3: memref<1xf32, #tpu.memory_space<smem>>, %arg4: memref<1x1x128xf32, #tpu.memory_space<vmem>>) attributes {dimension_semantics = [#tpu.dimension_semantics<parallel>], iteration_bounds = array<i64: 2>, scalar_prefetch = 0 : i64, scratch_operands = 0 : i64, tpu.core_type = #tpu.core_type<tc>, window_params = [{transform_indices = @transform_0, window_bounds = array<i64: 1, 8, 128>}, {pipeline_mode = #tpu.pipeline_mode<synchronous>, transform_indices = @transform_1, window_bounds = array<i64: 8, 128>}, {transform_indices = @transform_2, window_bounds = array<i64: 1>}, {transform_indices = @transform_3, window_bounds = array<i64: 1, 1, 128>}]} {
    %cst = arith.constant 0.000000e+00 : f32
    %0 = vector.broadcast %cst : f32 to vector<1x8x128xf32>
    %c0_i32 = arith.constant 0 : i32
    %c8_i32 = arith.constant 8 : i32
    %1 = arith.muli %c0_i32, %c8_i32 : i32
    %2 = tpu.assume_multiple %1, 8 : i32
    %c0 = arith.constant 0 : index
    %3 = arith.index_cast %2 : i32 to index
    %c0_0 = arith.constant 0 : index
    %4 = vector.load %arg1[%c0, %3, %c0_0] : memref<1x8x128xf32, #tpu.memory_space<vmem>>, vector<1x8x128xf32>
    %5 = arith.index_cast %2 : i32 to index
    %c0_1 = arith.constant 0 : index
    %6 = vector.load %arg2[%5, %c0_1] : memref<8x128xf32, #tpu.memory_space<vmem>>, vector<8x128xf32>
    %7 = vector.shape_cast %6 : vector<8x128xf32> to vector<1x8x128xf32>
    %8 = arith.mulf %4, %7 : vector<1x8x128xf32>
    %9 = arith.addf %0, %8 : vector<1x8x128xf32>
    %c1_i32 = arith.constant 1 : i32
    %cst_2 = arith.constant dense<0.000000e+00> : vector<1xf32>
    %10 = vector.multi_reduction <add>, %9, %cst_2 [1, 2] : vector<1x8x128xf32> to vector<1xf32>
    %11 = vector.shape_cast %10 : vector<1xf32> to vector<1x1xf32>
    %c0_3 = arith.constant 0 : index
    %12 = memref.load %arg3[%c0_3] : memref<1xf32, #tpu.memory_space<smem>>
    %13 = vector.broadcast %12 : f32 to vector<1x1xf32>
    %14 = arith.addf %11, %13 : vector<1x1xf32>
    %cst_4 = arith.constant 0.000000e+00 : f32
    %15 = vector.broadcast %cst_4 : f32 to vector<1x1xf32>
    %16 = arith.subf %15, %14 : vector<1x1xf32>
    %17 = math.exp %16 : vector<1x1xf32>
    %cst_5 = arith.constant 1.000000e+00 : f32
    %18 = vector.broadcast %cst_5 : f32 to vector<1x1xf32>
    %19 = arith.addf %18, %17 : vector<1x1xf32>
    %20 = tpu.reciprocal %19 : vector<1x1xf32> -> vector<1x1xf32>
    %21 = vector.shape_cast %20 : vector<1x1xf32> to vector<1x1x1xf32>
    %22 = vector.shape_cast %21 : vector<1x1x1xf32> to vector<1x1x1xf32>
    %23 = vector.broadcast %22 : vector<1x1x1xf32> to vector<1x1x128xf32>
    %c0_6 = arith.constant 0 : index
    %c0_7 = arith.constant 0 : index
    %c0_8 = arith.constant 0 : index
    %24 = vector.load %arg4[%c0_6, %c0_7, %c0_8] : memref<1x1x128xf32, #tpu.memory_space<vmem>>, vector<1x1x128xf32>
    tpu.vector_store %arg4[%c0_6, %c0_7, %c0_8], %23 {strides = array<i32>} : memref<1x1x128xf32, #tpu.memory_space<vmem>>, vector<1x1x128xf32>,
    return
  }
  func.func @transform_0(%arg0: i32) -> (i32, i32, i32) {
    %c0_i32 = arith.constant 0 : i32
    %c0_i32_0 = arith.constant 0 : i32
    %c0_i32_1 = arith.constant 0 : i32
    return %arg0, %c0_i32, %c0_i32_0 : i32, i32, i32
  }
  func.func @transform_1(%arg0: i32) -> (i32, i32) {
    %c0_i32 = arith.constant 0 : i32
    %c0_i32_0 = arith.constant 0 : i32
    %c0_i32_1 = arith.constant 0 : i32
    return %c0_i32, %c0_i32_0 : i32, i32
  }
  func.func @transform_2(%arg0: i32) -> i32 {
    %c0_i32 = arith.constant 0 : i32
    %c0_i32_0 = arith.constant 0 : i32
    return %c0_i32 : i32
  }
  func.func @transform_3(%arg0: i32) -> (i32, i32, i32) {
    %c0_i32 = arith.constant 0 : i32
    %c0_i32_0 = arith.constant 0 : i32
    %c0_i32_1 = arith.constant 0 : i32
    return %arg0, %c0_i32, %c0_i32_0 : i32, i32, i32
  }
}

</mosaic_0001>

<llo_original>
// kernel: logistic_regression.1
$region0: #{logistic_regression.1}
  #allocation0 [shape = 'u32[]', space=smem, size = 0x4, offset = 0x4, fixed_abs, tag = 'smem constant byte address 0x4 - core index']
  #allocation1 [shape = 'u32[72,128]{1,0:T(1,128)}', space=vmem, size = 0x9000, scoped, tag = 'internal scratch']
  #allocation2 [shape = 'f32[1]{0:T(128)S(6)}', space=smem, size = 0x200, scoped, tag = 'scoped memory for logistic_regression.1']
  %s0 = inlined_call_operand.vmem [shape: f32[2,8,128], index: 0, kind: input, shape index: {}]
  %s1 = inlined_call_operand.vmem [shape: f32[8,128], index: 1, kind: input, shape index: {}]
  %s2 = inlined_call_operand.<no memory space> [shape: f32[1], index: 2, kind: input, shape index: {}]
  %s3 = inlined_call_operand.vmem [shape: f32[2,1,128], index: 3, kind: output, shape index: {}]
  %s4 = sld [smem:[#allocation0]]
  $region45: #{logistic_regression.1} parent=0
    _
  %s6 = ssub.s32 1, %s4
  %s7 = scalar_select 0, %s6, %s4
  %8 = sst [smem:[#allocation2]] %s2
  loop: start=0, step=1, limit=4
  $region2: #{logistic_regression.1} parent=0 // loop_pre_header
    _
  $region3: #{logistic_regression.1} parent=0 // loop_header
    %s10 = sphi 0, %s14
    %p11 = scmp.ge.s32.totalorder %s10, 4
    %s20 = sphi 0, %s22
    %s23 = sphi 0, %s20
    %s24 = sphi 0, %s23
    %s40 = sphi 0, %s24
    %s44 = sphi 0, %s44
    %s46 = sphi 0, %s44
    %s47 = sphi 0, %s46
    %s61 = sphi 0, %s47
    %s65 = sphi 0, %s65
    %s67 = sphi 0, %s65
    %s68 = sphi 0, %s67
    %s82 = sphi 0, %s68
    %s88 = sphi 0, %s90
    %s91 = sphi 0, %s88
    %s92 = sphi 0, %s91
    %s108 = sphi 0, %s92
  $region4: #{logistic_regression.1} parent=0 // loop_header_branch
    %13 = sbr.rel (%p11) target = $region8
  $region5: #{logistic_regression.1} parent=0 // loop_body
    %s15 = ssub.s32 %s10, 1
    %s16 = ssub.s32 %s10, 2
    %s17 = sadd.s32 %s10, 1
    %s18 = ssub.s32 %s10, %s17
    %p19 = scmp.eq.s32.totalorder %s18, 0
    %s21 = sadd.s32 %s20, 1
    %s22 = scalar_select %p19, %s20, %s21
    %p25 = pneg %p19
    %p26 = scmp.eq.s32.totalorder %s10, 1
    %p27 = por %p25, %p26
    %p28 = scmp.ne.s32.totalorder %s20, %s23
    %p29 = scmp.eq.s32.totalorder %s10, 0
    %p30 = por %p28, %p29
    %p31 = scmp.ne.s32.totalorder %s20, %s23
    %p32 = scmp.eq.s32.totalorder %s15, 1
    %p33 = por %p31, %p32
    %p34 = scmp.ne.s32.totalorder %s23, %s24
    %p35 = scmp.eq.s32.totalorder %s15, 0
    %p36 = por %p34, %p35
    %p37 = scmp.ne.s32.totalorder %s23, %s24
    %p38 = scmp.eq.s32.totalorder %s16, 1
    %p39 = por %p37, %p38
    %p41 = scmp.ne.s32.totalorder %s24, %s40
    %p42 = scmp.eq.s32.totalorder %s16, 0
    %p43 = por %p41, %p42
    %s45 = sadd.s32 %s44, 1
    %p48 = scmp.eq.s32.totalorder %s10, 1
    %p49 = scmp.ne.s32.totalorder %s44, %s46
    %p50 = scmp.eq.s32.totalorder %s10, 0
    %p51 = por %p49, %p50
    %p52 = scmp.ne.s32.totalorder %s44, %s46
    %p53 = scmp.eq.s32.totalorder %s15, 1
    %p54 = por %p52, %p53
    %p55 = scmp.ne.s32.totalorder %s46, %s47
    %p56 = scmp.eq.s32.totalorder %s15, 0
    %p57 = por %p55, %p56
    %p58 = scmp.ne.s32.totalorder %s46, %s47
    %p59 = scmp.eq.s32.totalorder %s16, 1
    %p60 = por %p58, %p59
    %p62 = scmp.ne.s32.totalorder %s47, %s61
    %p63 = scmp.eq.s32.totalorder %s16, 0
    %p64 = por %p62, %p63
    %s66 = sadd.s32 %s65, 1
    %p69 = scmp.eq.s32.totalorder %s10, 1
    %p70 = scmp.ne.s32.totalorder %s65, %s67
    %p71 = scmp.eq.s32.totalorder %s10, 0
    %p72 = por %p70, %p71
    %p73 = scmp.ne.s32.totalorder %s65, %s67
    %p74 = scmp.eq.s32.totalorder %s15, 1
    %p75 = por %p73, %p74
    %p76 = scmp.ne.s32.totalorder %s67, %s68
    %p77 = scmp.eq.s32.totalorder %s15, 0
    %p78 = por %p76, %p77
    %p79 = scmp.ne.s32.totalorder %s67, %s68
    %p80 = scmp.eq.s32.totalorder %s16, 1
    %p81 = por %p79, %p80
    %p83 = scmp.ne.s32.totalorder %s68, %s82
    %p84 = scmp.eq.s32.totalorder %s16, 0
    %p85 = por %p83, %p84
    %s86 = ssub.s32 %s10, %s17
    %p87 = scmp.eq.s32.totalorder %s86, 0
    %s89 = sadd.s32 %s88, 1
    %s90 = scalar_select %p87, %s88, %s89
    %p93 = pneg %p87
    %p94 = scmp.eq.s32.totalorder %s10, 1
    %p95 = por %p93, %p94
    %p96 = scmp.ne.s32.totalorder %s88, %s91
    %p97 = scmp.eq.s32.totalorder %s10, 0
    %p98 = por %p96, %p97
    %p99 = scmp.ne.s32.totalorder %s88, %s91
    %p100 = scmp.eq.s32.totalorder %s15, 1
    %p101 = por %p99, %p100
    %p102 = scmp.ne.s32.totalorder %s91, %s92
    %p103 = scmp.eq.s32.totalorder %s15, 0
    %p104 = por %p102, %p103
    %p105 = scmp.ne.s32.totalorder %s91, %s92
    %p106 = scmp.eq.s32.totalorder %s16, 1
    %p107 = por %p105, %p106
    %p109 = scmp.ne.s32.totalorder %s92, %s108
    %p110 = scmp.eq.s32.totalorder %s16, 0
    %p111 = por %p109, %p110
    %p112 = scmp.le.s32.totalorder 1, %s10
    %p113 = scmp.lt.s32.totalorder %s10, 3
    %p114 = pnand %p112, %p113
    %p115 = pneg %p114
    // Predicated region
    $region9: #{logistic_regression.1} parent=5 // pred_check
      _
    $region10: #{logistic_regression.1} parent=5 // pred_check_branch
      %117 = sbr.rel (%p114) target = $region12
    $region11: #{logistic_regression.1} parent=5 // pred_region
      %s118 = ssub.s32 %s10, 1
      // Predicated region
      $region13: #{logistic_regression.1} parent=11 // pred_check
        %p119 = pneg %p57
      $region14: #{logistic_regression.1} parent=11 // pred_check_branch
        %121 = sbr.rel (%p119) target = $region16
      $region15: #{logistic_regression.1} parent=11 // pred_region
        _
      $region16: #{logistic_regression.1} parent=11 // pred_fallthru
        _
      // Predicated region
      $region17: #{logistic_regression.1} parent=11 // pred_check
        %p122 = pneg %p78
      $region18: #{logistic_regression.1} parent=11 // pred_check_branch
        %124 = sbr.rel (%p122) target = $region20
      $region19: #{logistic_regression.1} parent=11 // pred_region
        _
      $region20: #{logistic_regression.1} parent=11 // pred_fallthru
        _
    $region12: #{logistic_regression.1} parent=5 // pred_fallthru
      _
    %p125 = scmp.lt.s32.totalorder %s10, 2
    // Predicated region
    $region21: #{logistic_regression.1} parent=5 // pred_check
      %p126 = pneg %p125
    $region22: #{logistic_regression.1} parent=5 // pred_check_branch
      %128 = sbr.rel (%p126) target = $region24
    $region23: #{logistic_regression.1} parent=5 // pred_region
      // Predicated region
      $region25: #{logistic_regression.1} parent=23 // pred_check
        %p129 = pneg %p30
      $region26: #{logistic_regression.1} parent=23 // pred_check_branch
        %131 = sbr.rel (%p129) target = $region28
      $region27: #{logistic_regression.1} parent=23 // pred_region
        %p132 = scmp.lt.s32.totalorder %s10, 1
        %s133 = scalar_select %p132, %s10, 1
        %s134 = smul.addr %s133, 8
        %s135 = scalar_lea.vmem %s0, %s134
      $region28: #{logistic_regression.1} parent=23 // pred_fallthru
        _
    $region24: #{logistic_regression.1} parent=5 // pred_fallthru
      _
    %p136 = scmp.le.s32.totalorder 1, %s10
    %p137 = scmp.lt.s32.totalorder %s10, 3
    %p138 = pnand %p136, %p137
    %p139 = pneg %p138
    // Predicated region
    $region29: #{logistic_regression.1} parent=5 // pred_check
      _
    $region30: #{logistic_regression.1} parent=5 // pred_check_branch
      %141 = sbr.rel (%p138) target = $region32
    $region31: #{logistic_regression.1} parent=5 // pred_region
      %s142 = ssub.s32 %s10, 1
      %p143 = scmp.lt.s32.totalorder %s15, 1
      %s144 = scalar_select %p143, %s15, 1
      %s145 = smul.addr %s144, 8
      %s146 = scalar_lea.vmem %s0, %s145
      %p147 = pneg %p36
      %p148 = pneg %p33
      %p149 = pneg %p57
      %p150 = pneg %p54
      %p151 = pneg %p78
      %p152 = pneg %p75
      %p153 = pneg %p104
      %p154 = pneg %p101
      %p155 = scmp.lt.s32.totalorder %s15, 1
      %s156 = scalar_select %p155, %s15, 1
      %s157 = scalar_lea.vmem %s3, %s156
      %p158 = scmp.lt.s32.totalorder %s15, 1
      %s159 = scalar_select %p158, %s15, 1
      %s160 = smul.addr %s159, 8
      %s161 = scalar_lea.vmem %s0, %s160
      %p162 = scmp.lt.s32.totalorder %s15, 1
      %s163 = scalar_select %p162, %s15, 1
      %s164 = scalar_lea.vmem %s3, %s163
      %v165 = vld [vmem:[%s161] sm:$0xff]
      %v166 = vld [vmem:[%s1] sm:$0xff]
      %v167 = vmul.f32 %v165, %v166
      %v168 = vadd.f32 %v167, 0.0
      %169 = vadd.xlane.f32.xlu0 %v168
      %v170 = vpop.xlane.xlu0 %169
      %v171 = vrot.slane %v170, 4
      %v172 = vadd.f32 %v170, %v171
      %v173 = vrot.slane %v172, 2
      %v174 = vadd.f32 %v172, %v173
      %v175 = vrot.slane %v174, 1
      %v176 = vadd.f32 %v174, %v175
      %s177 = sld [smem:[#allocation2]]
      %v178 = vstv %s177
      %v179 = vadd.f32 %v176, %v178
      %v180 = vsub.f32 0.0, %v179
      %v181 = vmul.f32 %v180, 1.442695
      %v182 = vpow.pop %v181
      %v183 = vadd.f32 %v182, 1.0
      %v184 = vrcp.pop %v183
      %v185 = vmul.f32 %v183, %v184
      %v186 = vsub.f32 1.0, %v185
      %v187 = vmul.f32 %v184, %v186
      %v188 = vadd.f32 %v184, %v187
      %vm189 = vweird.f32 %v183
      %vm190 = vweird.f32 %v184
      %vm191 = vmor %vm189, %vm190
      %v192 = vsel %vm191, %v184, %v188
      %v193 = vand.u32 2147483647, %v183
      %vm194 = vcmp.eq.f32.partialorder %v193, 8.507059e+37
      %v195 = vand.u32 %v183, 2147483648
      %v196 = vor.u32 1.1754944e-38, %v195
      %v197 = vsel %vm194, %v196, %v192
      %198 = vst [vmem:[%s164] sm:$0x1] %v197
      %p199 = scmp.lt.s32.totalorder %s15, 1
      %s200 = scalar_select %p199, %s15, 1
      %s201 = scalar_lea.vmem %s3, %s200
      // Predicated region
      $region33: #{logistic_regression.1} parent=31 // pred_check
        %p202 = pneg %p101
      $region34: #{logistic_regression.1} parent=31 // pred_check_branch
        %204 = sbr.rel (%p202) target = $region36
      $region35: #{logistic_regression.1} parent=31 // pred_region
        _
      $region36: #{logistic_regression.1} parent=31 // pred_fallthru
        _
    $region32: #{logistic_regression.1} parent=5 // pred_fallthru
      _
    %p205 = scmp.le.s32.totalorder 2, %s10
    // Predicated region
    $region37: #{logistic_regression.1} parent=5 // pred_check
      %p206 = pneg %p205
    $region38: #{logistic_regression.1} parent=5 // pred_check_branch
      %208 = sbr.rel (%p206) target = $region40
    $region39: #{logistic_regression.1} parent=5 // pred_region
      %s209 = ssub.s32 %s10, 2
      // Predicated region
      $region41: #{logistic_regression.1} parent=39 // pred_check
        %p210 = pneg %p107
      $region42: #{logistic_regression.1} parent=39 // pred_check_branch
        %212 = sbr.rel (%p210) target = $region44
      $region43: #{logistic_regression.1} parent=39 // pred_region
        %p213 = scmp.lt.s32.totalorder %s16, 1
        %s214 = scalar_select %p213, %s16, 1
        %s215 = scalar_lea.vmem %s3, %s214
      $region44: #{logistic_regression.1} parent=39 // pred_fallthru
        _
    $region40: #{logistic_regression.1} parent=5 // pred_fallthru
      _
  $region6: #{logistic_regression.1} parent=0 // loop_footer
    %s14 = sadd.s32 1, %s10
  $region7: #{logistic_regression.1} parent=0 // loop_footer_branch
    %9 = sbr.rel target = $region3
  $region8: #{logistic_regression.1} parent=0 // loop_exit
    _

</llo_original>
